<compile_context>
chip_gen: v7x
topology: tpu7x:2x2x1
jax: 0.10.0
libtpu: 0.0.40
codegen_flags: <defaults>
</compile_context>

<pallas_src>
import jax
import jax.numpy as jnp
from jax import lax
from jax.experimental import pallas as pl
from jax.experimental.pallas import tpu as pltpu


def _round_up(x, m):
    return (x + m - 1) // m * m


def _ddit_final_kernel(x_ref, gain_ref, shift_ref, w_ref, b_ref, o_ref, mod_ref):
    """Grid = (batch, m_tile, v_tile), v innermost (sequential).

    x_ref:     (1, TM, H)  activations, native dtype (f32 or bf16)
    gain_ref:  (1, 1, H)   f32  w_ln * (1 + scale)   (per-batch, precomputed)
    shift_ref: (1, 1, H)   f32
    w_ref:     (H, TN)     bf16 projection-weight tile
    b_ref:     (1, TN)     f32  projection-bias tile
    o_ref:     (1, TM, TN) output tile (bf16 by default, f32 accumulation inside)
    mod_ref:   (TM, H)     bf16 VMEM scratch -- LN+modulation cached across V tiles
    """
    v = pl.program_id(2)

    # LayerNorm + modulation: compute only once per (batch, m_tile); reuse for
    # every V tile. Correct only because V is the innermost "arbitrary" axis.
    @pl.when(v == 0)
    def _():
        x = x_ref[0].astype(jnp.float32)                 # (TM, H)
        mean = jnp.mean(x, axis=-1, keepdims=True)
        xc = x - mean
        var = jnp.mean(xc * xc, axis=-1, keepdims=True)
        xn = xc * lax.rsqrt(var + 1e-5)                  # matches F.layer_norm eps
        mod = xn * gain_ref[0] + shift_ref[0]            # fused w_ln*(1+scale) + shift
        mod_ref[...] = mod.astype(jnp.bfloat16)

    # bf16 operands on the MXU, f32 accumulation, cast only at the store.
    acc = jnp.dot(mod_ref[...], w_ref[...], preferred_element_type=jnp.float32)
    o_ref[0] = (acc + b_ref[...]).astype(o_ref.dtype)


def prepare_params(params, *, lane=128):
    """One-time parameter prep (do at load time, NOT inside the jitted forward).

    * Transpose the big projection weight to (H, V) and cast to bf16.
    * Pad the vocab dim to a multiple of 128 once, so the forward never has to
      materialize a padded copy of the weight per call.
    """
    w_lin = params["w_lin"]                              # (V, H)
    V = w_lin.shape[0]
    V_p = _round_up(V, lane)
    w_t = jnp.transpose(w_lin).astype(jnp.bfloat16)      # (H, V)
    b = params["b_lin"].astype(jnp.float32).reshape(1, V)
    if V_p != V:
        w_t = jnp.pad(w_t, ((0, 0), (0, V_p - V)))
        b = jnp.pad(b, ((0, 0), (0, V_p - V)))
    return {
        "w_ada": params["w_ada"].astype(jnp.float32),    # (2H, C)
        "b_ada": params["b_ada"].astype(jnp.float32),    # (2H,)
        "w_ln": params["w_ln"].astype(jnp.float32),      # (H,)
        "w_lin_t": w_t,                                  # (H, V_p) bf16
        "b_lin": b,                                      # (1, V_p) f32
        "V": V,
    }


def ddit_final_layer(x, c, prepared, *, tm=1024, tn=512, out_dtype=jnp.bfloat16):
    """x: (B, S, H) (f32 or bf16, passed through natively); c: (B, C)."""
    B, S, H = x.shape
    w_lin_t = prepared["w_lin_t"]                        # (H, V_p) bf16, pre-padded
    b_lin = prepared["b_lin"]                            # (1, V_p) f32, pre-padded
    V = prepared["V"]
    V_p = w_lin_t.shape[1]

    # --- adaLN modulation hoisted out of the kernel (tiny M=1 matmul) ---------
    ss = c.astype(jnp.float32) @ prepared["w_ada"].T + prepared["b_ada"]   # (B, 2H)
    shift = ss[:, :H].reshape(B, 1, H)
    gain = (prepared["w_ln"][None, :] * (1.0 + ss[:, H:])).reshape(B, 1, H)

    x_isize = jnp.dtype(x.dtype).itemsize
    out_isize = jnp.dtype(out_dtype).itemsize

    # --- vocab tile: lane-aligned divisor of the (pre-padded) V_p -------------
    tn = max(128, min(tn - tn % 128, V_p))
    while V_p % tn:
        tn -= 128

    # --- VMEM budget from hardware (v7x: 64 MiB; v5e/v6e: 128 MiB) ------------
    try:
        vmem_cap = int(pltpu.get_tpu_info().vmem_capacity_bytes)
    except Exception:
        vmem_cap = 64 << 20
    vmem_budget = (vmem_cap * 3) // 4                    # ~48 MiB v7x / ~96 MiB v5e,v6e

    def _vmem_bytes(tm_):
        return (2 * tm_ * H * x_isize                    # x double-buffer (native dtype)
                + 2 * H * tn * 2                         # bf16 weight double-buffer
                + 2 * tm_ * tn * out_isize               # output double-buffer
                + tm_ * H * 2                            # cached LN+mod scratch (bf16)
                + 4 * H * 4 + 2 * tn * 4                 # gain / shift / bias
                + (2 << 20))                             # headroom

    # --- row tile: as large as VMEM allows (amortizes the re-streamed weight), -
    # --- sublane-aligned, prefer an exact divisor of S to avoid padding --------
    tm = max(8, min(tm - tm % 8, _round_up(S, 8)))
    while _vmem_bytes(tm) > vmem_budget and tm > 8:
        tm = max(8, (tm // 2) - ((tm // 2) % 8))
    if S % 8 == 0 and S % tm != 0:
        for cand in range(tm, max(8, tm // 4) - 1, -8):  # avoid pad if a decent divisor exists
            if S % cand == 0:
                tm = cand
                break
    S_p = _round_up(S, tm)
    # Megacore (v7x has 2 TensorCores): keep at least 2 parallel (b, m) tiles.
    while B * (S_p // tm) < 2 and tm > 8 and tm % 16 == 0:
        tm //= 2
        S_p = _round_up(S, tm)

    xk = x
    if S_p != S:
        xk = jnp.pad(x, ((0, 0), (0, S_p - S), (0, 0)))

    grid = (B, S_p // tm, V_p // tn)

    grid_spec = pltpu.PrefetchScalarGridSpec(
        num_scalar_prefetch=0,
        grid=grid,
        in_specs=[
            pl.BlockSpec((1, tm, H), lambda b, m, v: (b, m, 0)),   # x (native dtype)
            pl.BlockSpec((1, 1, H), lambda b, m, v: (b, 0, 0)),    # gain
            pl.BlockSpec((1, 1, H), lambda b, m, v: (b, 0, 0)),    # shift
            pl.BlockSpec((H, tn), lambda b, m, v: (0, v)),         # w_lin_t (bf16)
            pl.BlockSpec((1, tn), lambda b, m, v: (0, v)),         # b_lin
        ],
        out_specs=pl.BlockSpec((1, tm, tn), lambda b, m, v: (b, m, v)),
        scratch_shapes=[pltpu.VMEM((tm, H), jnp.bfloat16)],        # cached LN+mod
    )

    # Accurate HBM traffic: weight is re-streamed once per (b, m_tile); x read
    # once; logits written once at out_isize.
    n_row_tiles = B * (S_p // tm)
    cost = pl.CostEstimate(
        flops=2 * B * S_p * H * V_p,
        transcendentals=B * S_p,
        bytes_accessed=int(B * S_p * H * x_isize
                           + n_row_tiles * H * V_p * 2
                           + B * S_p * V_p * out_isize
                           + 4 * B * H * 4 + 2 * V_p * 4),
    )

    out = pl.pallas_call(
        _ddit_final_kernel,
        out_shape=jax.ShapeDtypeStruct((B, S_p, V_p), out_dtype),
        grid_spec=grid_spec,
        compiler_params=pltpu.CompilerParams(
            dimension_semantics=("parallel", "parallel", "arbitrary"),
            vmem_limit_bytes=int(vmem_budget),
        ),
        cost_estimate=cost,
    )(xk, gain, shift, w_lin_t, b_lin)

    if S_p != S or V_p != V:
        # Only triggers when S is not tile-aligned or V is not 128-aligned.
        out = out[:, :S, :V]
    return out


def _reference(x, c, params):
    """Pure-JAX f32 reference matching the PyTorch forward."""
    H = x.shape[-1]
    ss = c.astype(jnp.float32) @ params["w_ada"].T + params["b_ada"]   # (B, 2H)
    shift, scale = ss[:, None, :H], ss[:, None, H:]                    # (B, 1, H)
    xf = x.astype(jnp.float32)
    mean = jnp.mean(xf, axis=-1, keepdims=True)
    var = jnp.mean((xf - mean) ** 2, axis=-1, keepdims=True)
    xn = (xf - mean) / jnp.sqrt(var + 1e-5)
    xn = xn * params["w_ln"][None, None, :]
    mod = xn * (1.0 + scale) + shift
    return mod @ params["w_lin"].T + params["b_lin"]


if __name__ == "__main__":
    B, S, H, C, V = 2, 8, 32, 16, 24

    key = jax.random.PRNGKey(0)
    kx, kc, k1, k2, k3, k4, k5 = jax.random.split(key, 7)

    x = jax.random.normal(kx, (B, S, H), dtype=jnp.float32)
    c = jax.random.normal(kc, (B, C), dtype=jnp.float32)

    params = {
        # the module zero-inits these; use small deterministic values instead
        "w_ada": 0.05 * jax.random.normal(k1, (2 * H, C), dtype=jnp.float32),
        "b_ada": 0.05 * jax.random.normal(k2, (2 * H,), dtype=jnp.float32),
        "w_ln": jnp.ones((H,), dtype=jnp.float32)
                + 0.1 * jax.random.normal(k3, (H,), dtype=jnp.float32),
        "w_lin": 0.05 * jax.random.normal(k4, (V, H), dtype=jnp.float32),
        "b_lin": 0.05 * jax.random.normal(k5, (V,), dtype=jnp.float32),
    }

    prepared = prepare_params(params)
    out = jax.block_until_ready(ddit_final_layer(x, c, prepared))
    ref = jax.block_until_ready(_reference(x, c, params))

    assert out.shape == (B, S, V)
    assert out.dtype == jnp.bfloat16
    # bf16 MXU operands + bf16 logits with f32 accumulation -> loosened tolerance.
    assert jnp.allclose(out.astype(jnp.float32), ref, atol=2e-2, rtol=2e-2), \
        "mismatch vs reference"
    print("KERNEL_OK")
</pallas_src>

<mosaic_0001>
module attributes {stable_mosaic.version = 11 : i64} {
  func.func @_ddit_final_kernel(%arg0: i32, %arg1: i32, %arg2: i32, %arg3: memref<1x8x32xf32, #tpu.memory_space<vmem>>, %arg4: memref<1x1x32xf32, #tpu.memory_space<vmem>>, %arg5: memref<1x1x32xf32, #tpu.memory_space<vmem>>, %arg6: memref<32x128xbf16, #tpu.memory_space<vmem>>, %arg7: memref<1x128xf32, #tpu.memory_space<vmem>>, %arg8: memref<1x8x128xbf16, #tpu.memory_space<vmem>>, %arg9: memref<8x32xbf16, #tpu.memory_space<vmem>>) attributes {dimension_semantics = [#tpu.dimension_semantics<parallel>, #tpu.dimension_semantics<parallel>, #tpu.dimension_semantics<arbitrary>], iteration_bounds = array<i64: 2, 1, 1>, scalar_prefetch = 0 : i64, scratch_operands = 1 : i64, tpu.core_type = #tpu.core_type<tc>, window_params = [{transform_indices = @transform_0, window_bounds = array<i64: 1, 8, 32>}, {transform_indices = @transform_1, window_bounds = array<i64: 1, 1, 32>}, {transform_indices = @transform_2, window_bounds = array<i64: 1, 1, 32>}, {transform_indices = @transform_3, window_bounds = array<i64: 32, 128>}, {transform_indices = @transform_4, window_bounds = array<i64: 1, 128>}, {transform_indices = @transform_5, window_bounds = array<i64: 1, 8, 128>}]} {
    %c0_i32 = arith.constant 0 : i32
    %0 = arith.cmpi eq, %arg2, %c0_i32 : i32
    %1 = arith.extui %0 : i1 to i32
    %c0_i32_0 = arith.constant 0 : i32
    %2 = arith.cmpi ne, %1, %c0_i32_0 : i32
    scf.if %2 {
      %c0_9 = arith.constant 0 : index
      %c0_10 = arith.constant 0 : index
      %c0_11 = arith.constant 0 : index
      %13 = vector.load %arg3[%c0_9, %c0_10, %c0_11] : memref<1x8x32xf32, #tpu.memory_space<vmem>>, vector<1x8x32xf32>
      %14 = vector.shape_cast %13 : vector<1x8x32xf32> to vector<8x32xf32>
      %cst_12 = arith.constant dense<0.000000e+00> : vector<8xf32>
      %15 = vector.multi_reduction <add>, %14, %cst_12 [1] : vector<8x32xf32> to vector<8xf32>
      %16 = vector.shape_cast %15 : vector<8xf32> to vector<8x1xf32>
      %cst_13 = arith.constant 3.200000e+01 : f32
      %17 = vector.broadcast %cst_13 : f32 to vector<8x1xf32>
      %18 = arith.divf %16, %17 : vector<8x1xf32>
      %19 = vector.broadcast %18 : vector<8x1xf32> to vector<8x32xf32>
      %20 = arith.subf %14, %19 : vector<8x32xf32>
      %21 = arith.mulf %20, %20 : vector<8x32xf32>
      %cst_14 = arith.constant dense<0.000000e+00> : vector<8xf32>
      %22 = vector.multi_reduction <add>, %21, %cst_14 [1] : vector<8x32xf32> to vector<8xf32>
      %23 = vector.shape_cast %22 : vector<8xf32> to vector<8x1xf32>
      %cst_15 = arith.constant 3.200000e+01 : f32
      %24 = vector.broadcast %cst_15 : f32 to vector<8x1xf32>
      %25 = arith.divf %23, %24 : vector<8x1xf32>
      %cst_16 = arith.constant 9.99999974E-6 : f32
      %26 = vector.broadcast %cst_16 : f32 to vector<8x1xf32>
      %27 = arith.addf %25, %26 : vector<8x1xf32>
      %28 = math.rsqrt %27 : vector<8x1xf32>
      %29 = vector.broadcast %28 : vector<8x1xf32> to vector<8x32xf32>
      %30 = arith.mulf %20, %29 : vector<8x32xf32>
      %c0_17 = arith.constant 0 : index
      %c0_18 = arith.constant 0 : index
      %c0_19 = arith.constant 0 : index
      %31 = vector.load %arg4[%c0_17, %c0_18, %c0_19] : memref<1x1x32xf32, #tpu.memory_space<vmem>>, vector<1x1x32xf32>
      %32 = vector.shape_cast %31 : vector<1x1x32xf32> to vector<1x32xf32>
      %33 = vector.broadcast %32 : vector<1x32xf32> to vector<8x32xf32>
      %34 = arith.mulf %30, %33 : vector<8x32xf32>
      %c0_20 = arith.constant 0 : index
      %c0_21 = arith.constant 0 : index
      %c0_22 = arith.constant 0 : index
      %35 = vector.load %arg5[%c0_20, %c0_21, %c0_22] : memref<1x1x32xf32, #tpu.memory_space<vmem>>, vector<1x1x32xf32>
      %36 = vector.shape_cast %35 : vector<1x1x32xf32> to vector<1x32xf32>
      %37 = vector.broadcast %36 : vector<1x32xf32> to vector<8x32xf32>
      %38 = arith.addf %34, %37 : vector<8x32xf32>
      %39 = arith.truncf %38 : vector<8x32xf32> to vector<8x32xbf16>
      %c0_23 = arith.constant 0 : index
      %c0_24 = arith.constant 0 : index
      %40 = vector.load %arg9[%c0_23, %c0_24] : memref<8x32xbf16, #tpu.memory_space<vmem>>, vector<8x32xbf16>
      tpu.vector_store %arg9[%c0_23, %c0_24], %39 {strides = array<i32>} : memref<8x32xbf16, #tpu.memory_space<vmem>>, vector<8x32xbf16>,
    } else {
    }
    %c0 = arith.constant 0 : index
    %c0_1 = arith.constant 0 : index
    %3 = vector.load %arg9[%c0, %c0_1] : memref<8x32xbf16, #tpu.memory_space<vmem>>, vector<8x32xbf16>
    %c0_2 = arith.constant 0 : index
    %c0_3 = arith.constant 0 : index
    %4 = vector.load %arg6[%c0_2, %c0_3] : memref<32x128xbf16, #tpu.memory_space<vmem>>, vector<32x128xbf16>
    %cst = arith.constant dense<0.000000e+00> : vector<8x128xf32>
    %5 = tpu.matmul %3, %4, %cst {dimension_numbers = #tpu.dot_dimension_numbers<[1], [0], [0], [1], [0, 0, 1, 1], [], []>} : vector<8x32xbf16>, vector<32x128xbf16>, vector<8x128xf32> -> vector<8x128xf32>
    %c0_4 = arith.constant 0 : index
    %c0_5 = arith.constant 0 : index
    %6 = vector.load %arg7[%c0_4, %c0_5] : memref<1x128xf32, #tpu.memory_space<vmem>>, vector<1x128xf32>
    %7 = vector.broadcast %6 : vector<1x128xf32> to vector<8x128xf32>
    %8 = arith.addf %5, %7 : vector<8x128xf32>
    %9 = arith.truncf %8 : vector<8x128xf32> to vector<8x128xbf16>
    %c0_6 = arith.constant 0 : index
    %c0_7 = arith.constant 0 : index
    %c0_8 = arith.constant 0 : index
    %10 = vector.load %arg8[%c0_6, %c0_7, %c0_8] : memref<1x8x128xbf16, #tpu.memory_space<vmem>>, vector<1x8x128xbf16>
    %11 = vector.shape_cast %10 : vector<1x8x128xbf16> to vector<8x128xbf16>
    %12 = vector.shape_cast %9 : vector<8x128xbf16> to vector<1x8x128xbf16>
    tpu.vector_store %arg8[%c0_6, %c0_7, %c0_8], %12 {strides = array<i32>} : memref<1x8x128xbf16, #tpu.memory_space<vmem>>, vector<1x8x128xbf16>,
    return
  }
  func.func @transform_0(%arg0: i32, %arg1: i32, %arg2: i32) -> (i32, i32, i32) {
    %c0_i32 = arith.constant 0 : i32
    %c0_i32_0 = arith.constant 0 : i32
    return %arg0, %arg1, %c0_i32 : i32, i32, i32
  }
  func.func @transform_1(%arg0: i32, %arg1: i32, %arg2: i32) -> (i32, i32, i32) {
    %c0_i32 = arith.constant 0 : i32
    %c0_i32_0 = arith.constant 0 : i32
    %c0_i32_1 = arith.constant 0 : i32
    return %arg0, %c0_i32, %c0_i32_0 : i32, i32, i32
  }
  func.func @transform_2(%arg0: i32, %arg1: i32, %arg2: i32) -> (i32, i32, i32) {
    %c0_i32 = arith.constant 0 : i32
    %c0_i32_0 = arith.constant 0 : i32
    %c0_i32_1 = arith.constant 0 : i32
    return %arg0, %c0_i32, %c0_i32_0 : i32, i32, i32
  }
  func.func @transform_3(%arg0: i32, %arg1: i32, %arg2: i32) -> (i32, i32) {
    %c0_i32 = arith.constant 0 : i32
    %c0_i32_0 = arith.constant 0 : i32
    return %c0_i32, %arg2 : i32, i32
  }
  func.func @transform_4(%arg0: i32, %arg1: i32, %arg2: i32) -> (i32, i32) {
    %c0_i32 = arith.constant 0 : i32
    %c0_i32_0 = arith.constant 0 : i32
    return %c0_i32, %arg2 : i32, i32
  }
  func.func @transform_5(%arg0: i32, %arg1: i32, %arg2: i32) -> (i32, i32, i32) {
    %c0_i32 = arith.constant 0 : i32
    return %arg0, %arg1, %arg2 : i32, i32, i32
  }
}

</mosaic_0001>

<llo_original>
// kernel: tpu_custom_call.1
$region0: #{tpu_custom_call.1}
  #allocation0 [shape = 'u32[]', space=smem, size = 0x4, offset = 0x4, fixed_abs, tag = 'smem constant byte address 0x4 - core index']
  #allocation1 [shape = 'u32[144,128]{1,0:T(1,128)}', space=vmem, size = 0x12000, scoped, tag = 'internal scratch']
  #allocation2 [shape = 'bf16[8,32]{1,0:T(8,128)(2,1)}', space=vmem, size = 0x800, scoped, tag = 'scratch operand']
  %s0 = inlined_call_operand.hbm [shape: f32[2,8,32], index: 0, kind: input, shape index: {}]
  %s1 = inlined_call_operand.vmem [shape: f32[2,1,32], index: 1, kind: input, shape index: {}]
  %s2 = inlined_call_operand.vmem [shape: f32[2,1,32], index: 2, kind: input, shape index: {}]
  %s3 = inlined_call_operand.hbm [shape: bf16[32,128], index: 3, kind: input, shape index: {}]
  %s4 = inlined_call_operand.vmem [shape: f32[1,128], index: 4, kind: input, shape index: {}]
  %s5 = inlined_call_operand.hbm [shape: bf16[2,8,128], index: 5, kind: output, shape index: {}]
  %s6 = sld [smem:[#allocation0]]
  $region65: #{tpu_custom_call.1} parent=0
    _
  %s8 = ssub.s32 1, %s6
  %s9 = scalar_select 0, %s8, %s6
  $region1: #{tpu_custom_call.1} parent=0
    #allocation3 [shape = 'u8[8192]{0}', space=vmem, size = 0x2000, scoped, tag = 'input window, operand 0']
    #allocation4 [shape = 's32[2]{0}', space=sflag, size = 0x8, scoped, tag = 'scoped memory for tpu_custom_call.1']
    #allocation5 [shape = 's32[2]{0}', space=sflag, size = 0x8, scoped, tag = 'scoped memory for tpu_custom_call.1']
    #allocation6 [shape = 'u8[8192]{0}', space=vmem, size = 0x2000, scoped, tag = 'input window, operand 3, single buffered']
    #allocation7 [shape = 's32[1]{0}', space=sflag, size = 0x4, scoped, tag = 'scoped memory for tpu_custom_call.1']
    #allocation8 [shape = 'u8[4096]{0}', space=vmem, size = 0x1000, scoped, tag = 'output window, operand 0']
    %10 = vsyncpa [#allocation4], 0
    %s11 = scalar_lea.sflag [#allocation4], 1
    %12 = vsyncpa %s11, 0
    %13 = vsyncpa [#allocation7], 0
    %14 = vsyncpa [#allocation5], 0
    %s15 = scalar_lea.sflag [#allocation5], 1
    %16 = vsyncpa %s15, 0
    loop: start=0, step=1, limit=4
    $region2: #{tpu_custom_call.1} parent=1 // loop_pre_header
      _
    $region3: #{tpu_custom_call.1} parent=1 // loop_header
      %s18 = sphi 0, %s22
      %p19 = scmp.ge.s32.totalorder %s18, 4
      %s25 = sphi 0, %s44
      %s26 = sphi 0, %s40
      %s27 = sphi 0, %s36
      %s28 = sphi 0, %s25
      %s29 = sphi 0, %s26
      %s30 = sphi 0, %s27
      %s31 = sphi 0, %s28
      %s32 = sphi 0, %s29
      %s33 = sphi 0, %s30
      %s49 = sphi 0, %s51
      %s52 = sphi 0, %s49
      %s53 = sphi 0, %s52
      %s69 = sphi 0, %s53
      %s75 = sphi 0, %s77
      %s78 = sphi 0, %s75
      %s79 = sphi 0, %s78
      %s95 = sphi 0, %s79
      %s101 = sphi 0, %s103
      %s104 = sphi 0, %s101
      %s105 = sphi 0, %s104
      %s121 = sphi 0, %s105
      %s127 = sphi 0, %s129
      %s130 = sphi 0, %s127
      %s131 = sphi 0, %s130
      %s147 = sphi 0, %s131
      %s153 = sphi 0, %s155
      %s156 = sphi 0, %s153
      %s157 = sphi 0, %s156
      %s173 = sphi 0, %s157
      %s183 = sphi 0, %s185
      %s186 = sphi 0, %s183
      %s187 = sphi 0, %s186
      %s203 = sphi 0, %s187
    $region4: #{tpu_custom_call.1} parent=1 // loop_header_branch
      %21 = sbr.rel (%p19) target = $region8
    $region5: #{tpu_custom_call.1} parent=1 // loop_body
      %s23 = ssub.s32 %s18, 1
      %s24 = ssub.s32 %s18, 2
      %s34 = sadd.s32 1, %s27
      %p35 = scmp.ge.s32.totalorder %s34, 1
      %s36 = scalar_select %p35, 0, %s34
      %s37 = sadd.s32 1, %s26
      %s38 = scalar_select %p35, %s37, %s26
      %p39 = scmp.ge.s32.totalorder %s38, 1
      %s40 = scalar_select %p39, 0, %s38
      %s41 = sadd.s32 1, %s25
      %s42 = scalar_select %p39, %s41, %s25
      %p43 = scmp.ge.s32.totalorder %s42, 2
      %s44 = scalar_select %p43, 0, %s42
      %s45 = ssub.s32 %s25, %s44
      %s46 = ssub.s32 %s26, %s40
      %s47 = sor.u32 %s45, %s46
      %p48 = scmp.eq.s32.totalorder %s47, 0
      %s50 = sadd.s32 %s49, 1
      %s51 = scalar_select %p48, %s49, %s50
      %p54 = pneg %p48
      %p55 = scmp.eq.s32.totalorder %s18, 1
      %p56 = por %p54, %p55
      %p57 = scmp.ne.s32.totalorder %s49, %s52
      %p58 = scmp.eq.s32.totalorder %s18, 0
      %p59 = por %p57, %p58
      %p60 = scmp.ne.s32.totalorder %s49, %s52
      %p61 = scmp.eq.s32.totalorder %s23, 1
      %p62 = por %p60, %p61
      %p63 = scmp.ne.s32.totalorder %s52, %s53
      %p64 = scmp.eq.s32.totalorder %s23, 0
      %p65 = por %p63, %p64
      %p66 = scmp.ne.s32.totalorder %s52, %s53
      %p67 = scmp.eq.s32.totalorder %s24, 1
      %p68 = por %p66, %p67
      %p70 = scmp.ne.s32.totalorder %s53, %s69
      %p71 = scmp.eq.s32.totalorder %s24, 0
      %p72 = por %p70, %p71
      %s73 = ssub.s32 %s25, %s44
      %p74 = scmp.eq.s32.totalorder %s73, 0
      %s76 = sadd.s32 %s75, 1
      %s77 = scalar_select %p74, %s75, %s76
      %p80 = pneg %p74
      %p81 = scmp.eq.s32.totalorder %s18, 1
      %p82 = por %p80, %p81
      %p83 = scmp.ne.s32.totalorder %s75, %s78
      %p84 = scmp.eq.s32.totalorder %s18, 0
      %p85 = por %p83, %p84
      %p86 = scmp.ne.s32.totalorder %s75, %s78
      %p87 = scmp.eq.s32.totalorder %s23, 1
      %p88 = por %p86, %p87
      %p89 = scmp.ne.s32.totalorder %s78, %s79
      %p90 = scmp.eq.s32.totalorder %s23, 0
      %p91 = por %p89, %p90
      %p92 = scmp.ne.s32.totalorder %s78, %s79
      %p93 = scmp.eq.s32.totalorder %s24, 1
      %p94 = por %p92, %p93
      %p96 = scmp.ne.s32.totalorder %s79, %s95
      %p97 = scmp.eq.s32.totalorder %s24, 0
      %p98 = por %p96, %p97
      %s99 = ssub.s32 %s25, %s44
      %p100 = scmp.eq.s32.totalorder %s99, 0
      %s102 = sadd.s32 %s101, 1
      %s103 = scalar_select %p100, %s101, %s102
      %p106 = pneg %p100
      %p107 = scmp.eq.s32.totalorder %s18, 1
      %p108 = por %p106, %p107
      %p109 = scmp.ne.s32.totalorder %s101, %s104
      %p110 = scmp.eq.s32.totalorder %s18, 0
      %p111 = por %p109, %p110
      %p112 = scmp.ne.s32.totalorder %s101, %s104
      %p113 = scmp.eq.s32.totalorder %s23, 1
      %p114 = por %p112, %p113
      %p115 = scmp.ne.s32.totalorder %s104, %s105
      %p116 = scmp.eq.s32.totalorder %s23, 0
      %p117 = por %p115, %p116
      %p118 = scmp.ne.s32.totalorder %s104, %s105
      %p119 = scmp.eq.s32.totalorder %s24, 1
      %p120 = por %p118, %p119
      %p122 = scmp.ne.s32.totalorder %s105, %s121
      %p123 = scmp.eq.s32.totalorder %s24, 0
      %p124 = por %p122, %p123
      %s125 = ssub.s32 %s27, %s36
      %p126 = scmp.eq.s32.totalorder %s125, 0
      %s128 = sadd.s32 %s127, 1
      %s129 = scalar_select %p126, %s127, %s128
      %p132 = pneg %p126
      %p133 = scmp.eq.s32.totalorder %s18, 1
      %p134 = por %p132, %p133
      %p135 = scmp.ne.s32.totalorder %s127, %s130
      %p136 = scmp.eq.s32.totalorder %s18, 0
      %p137 = por %p135, %p136
      %p138 = scmp.ne.s32.totalorder %s127, %s130
      %p139 = scmp.eq.s32.totalorder %s23, 1
      %p140 = por %p138, %p139
      %p141 = scmp.ne.s32.totalorder %s130, %s131
      %p142 = scmp.eq.s32.totalorder %s23, 0
      %p143 = por %p141, %p142
      %p144 = scmp.ne.s32.totalorder %s130, %s131
      %p145 = scmp.eq.s32.totalorder %s24, 1
      %p146 = por %p144, %p145
      %p148 = scmp.ne.s32.totalorder %s131, %s147
      %p149 = scmp.eq.s32.totalorder %s24, 0
      %p150 = por %p148, %p149
      %s151 = ssub.s32 %s27, %s36
      %p152 = scmp.eq.s32.totalorder %s151, 0
      %s154 = sadd.s32 %s153, 1
      %s155 = scalar_select %p152, %s153, %s154
      %p158 = pneg %p152
      %p159 = scmp.eq.s32.totalorder %s18, 1
      %p160 = por %p158, %p159
      %p161 = scmp.ne.s32.totalorder %s153, %s156
      %p162 = scmp.eq.s32.totalorder %s18, 0
      %p163 = por %p161, %p162
      %p164 = scmp.ne.s32.totalorder %s153, %s156
      %p165 = scmp.eq.s32.totalorder %s23, 1
      %p166 = por %p164, %p165
      %p167 = scmp.ne.s32.totalorder %s156, %s157
      %p168 = scmp.eq.s32.totalorder %s23, 0
      %p169 = por %p167, %p168
      %p170 = scmp.ne.s32.totalorder %s156, %s157
      %p171 = scmp.eq.s32.totalorder %s24, 1
      %p172 = por %p170, %p171
      %p174 = scmp.ne.s32.totalorder %s157, %s173
      %p175 = scmp.eq.s32.totalorder %s24, 0
      %p176 = por %p174, %p175
      %s177 = ssub.s32 %s25, %s44
      %s178 = ssub.s32 %s26, %s40
      %s179 = sor.u32 %s177, %s178
      %s180 = ssub.s32 %s27, %s36
      %s181 = sor.u32 %s179, %s180
      %p182 = scmp.eq.s32.totalorder %s181, 0
      %s184 = sadd.s32 %s183, 1
      %s185 = scalar_select %p182, %s183, %s184
      %p188 = pneg %p182
      %p189 = scmp.eq.s32.totalorder %s18, 1
      %p190 = por %p188, %p189
      %p191 = scmp.ne.s32.totalorder %s183, %s186
      %p192 = scmp.eq.s32.totalorder %s18, 0
      %p193 = por %p191, %p192
      %p194 = scmp.ne.s32.totalorder %s183, %s186
      %p195 = scmp.eq.s32.totalorder %s23, 1
      %p196 = por %p194, %p195
      %p197 = scmp.ne.s32.totalorder %s186, %s187
      %p198 = scmp.eq.s32.totalorder %s23, 0
      %p199 = por %p197, %p198
      %p200 = scmp.ne.s32.totalorder %s186, %s187
      %p201 = scmp.eq.s32.totalorder %s24, 1
      %p202 = por %p200, %p201
      %p204 = scmp.ne.s32.totalorder %s187, %s203
      %p205 = scmp.eq.s32.totalorder %s24, 0
      %p206 = por %p204, %p205
      %p207 = scmp.le.s32.totalorder 1, %s18
      %p208 = scmp.lt.s32.totalorder %s18, 3
      %p209 = pnand %p207, %p208
      %p210 = pneg %p209
      // Predicated region
      $region9: #{tpu_custom_call.1} parent=5 // pred_check
        _
      $region10: #{tpu_custom_call.1} parent=5 // pred_check_branch
        %212 = sbr.rel (%p209) target = $region12
      $region11: #{tpu_custom_call.1} parent=5 // pred_region
        %s213 = ssub.s32 %s18, 1
        // Predicated region
        $region13: #{tpu_custom_call.1} parent=11 // pred_check
          %p214 = pneg %p143
        $region14: #{tpu_custom_call.1} parent=11 // pred_check_branch
          %216 = sbr.rel (%p214) target = $region16
        $region15: #{tpu_custom_call.1} parent=11 // pred_region
          %s218 = ssub.s32 256, 256
          %219 = vsyncadd [#allocation7], %s218
          %s220 = smul.addr %s30, 64
          %s221 = scalar_lea.hbm %s3, %s220
          %s222 = sshll.u32 [#allocation6], 4
          %s223 = int_to_ptr.vmem [resolvable:$true] %s222
          %228 = dma.hbm_to_vmem [thread:$0]  %s221, 256, %s223, [#allocation7], 64, 64, 4
        $region16: #{tpu_custom_call.1} parent=11 // pred_fallthru
          _
        // Predicated region
        $region17: #{tpu_custom_call.1} parent=11 // pred_check
          %p229 = pneg %p169
        $region18: #{tpu_custom_call.1} parent=11 // pred_check_branch
          %231 = sbr.rel (%p229) target = $region20
        $region19: #{tpu_custom_call.1} parent=11 // pred_region
          %p232 = scmp.lt.s32.totalorder %s30, 0
          %s233 = scalar_select %p232, %s30, 0
          %s234 = scalar_lea.vmem %s4, %s233
        $region20: #{tpu_custom_call.1} parent=11 // pred_fallthru
          _
      $region12: #{tpu_custom_call.1} parent=5 // pred_fallthru
        _
      %p235 = scmp.lt.s32.totalorder %s18, 2
      // Predicated region
      $region21: #{tpu_custom_call.1} parent=5 // pred_check
        %p236 = pneg %p235
      $region22: #{tpu_custom_call.1} parent=5 // pred_check_branch
        %238 = sbr.rel (%p236) target = $region24
      $region23: #{tpu_custom_call.1} parent=5 // pred_region
        // Predicated region
        $region25: #{tpu_custom_call.1} parent=23 // pred_check
          %p239 = pneg %p59
        $region26: #{tpu_custom_call.1} parent=23 // pred_check_branch
          %241 = sbr.rel (%p239) target = $region28
        $region27: #{tpu_custom_call.1} parent=23 // pred_region
          %s242 = sand.u32 %s49, 1
          %s243 = scalar_lea.sflag [#allocation4], %s242
          %s244 = sand.u32 %s49, 1
          %s245 = smul.addr %s244, 8
          %s246 = scalar_lea.vmem [#allocation3], %s245
          %s248 = ssub.s32 128, 128
          %249 = vsyncadd %s243, %s248
          %s250 = sadd.s32 %s26, %s25
          %s251 = smul.addr %s250, 128
          %s252 = scalar_lea.hbm %s0, %s251
          %s254 = sshll.u32 %s246, 4
          %s255 = int_to_ptr.vmem [resolvable:$true] %s254
          %257 = dma.hbm_to_vmem [thread:$0]  %s252, 128, %s255, %s243
        $region28: #{tpu_custom_call.1} parent=23 // pred_fallthru
          _
        // Predicated region
        $region29: #{tpu_custom_call.1} parent=23 // pred_check
          %p258 = pneg %p85
        $region30: #{tpu_custom_call.1} parent=23 // pred_check_branch
          %260 = sbr.rel (%p258) target = $region32
        $region31: #{tpu_custom_call.1} parent=23 // pred_region
          %p261 = scmp.lt.s32.totalorder %s25, 1
          %s262 = scalar_select %p261, %s25, 1
          %s263 = scalar_lea.vmem %s1, %s262
        $region32: #{tpu_custom_call.1} parent=23 // pred_fallthru
          _
        // Predicated region
        $region33: #{tpu_custom_call.1} parent=23 // pred_check
          %p264 = pneg %p111
        $region34: #{tpu_custom_call.1} parent=23 // pred_check_branch
          %266 = sbr.rel (%p264) target = $region36
        $region35: #{tpu_custom_call.1} parent=23 // pred_region
          %p267 = scmp.lt.s32.totalorder %s25, 1
          %s268 = scalar_select %p267, %s25, 1
          %s269 = scalar_lea.vmem %s2, %s268
        $region36: #{tpu_custom_call.1} parent=23 // pred_fallthru
          _
      $region24: #{tpu_custom_call.1} parent=5 // pred_fallthru
        _
      %p270 = scmp.le.s32.totalorder 1, %s18
      %p271 = scmp.lt.s32.totalorder %s18, 3
      %p272 = pnand %p270, %p271
      %p273 = pneg %p272
      // Predicated region
      $region37: #{tpu_custom_call.1} parent=5 // pred_check
        _
      $region38: #{tpu_custom_call.1} parent=5 // pred_check_branch
        %275 = sbr.rel (%p272) target = $region40
      $region39: #{tpu_custom_call.1} parent=5 // pred_region
        %s276 = ssub.s32 %s18, 1
        %s277 = sand.u32 %s52, 1
        %s278 = scalar_lea.sflag [#allocation4], %s277
        %s279 = sand.u32 %s52, 1
        %s280 = smul.addr %s279, 8
        %s281 = scalar_lea.vmem [#allocation3], %s280
        // Predicated region
        $region41: #{tpu_custom_call.1} parent=39 // pred_check
          %p282 = pneg %p65
        $region42: #{tpu_custom_call.1} parent=39 // pred_check_branch
          %284 = sbr.rel (%p282) target = $region44
        $region43: #{tpu_custom_call.1} parent=39 // pred_region
          %285 = dma.done %s278, 128
        $region44: #{tpu_custom_call.1} parent=39 // pred_fallthru
          _
        // Predicated region
        $region45: #{tpu_custom_call.1} parent=39 // pred_check
          %p286 = pneg %p143
        $region46: #{tpu_custom_call.1} parent=39 // pred_check_branch
          %288 = sbr.rel (%p286) target = $region48
        $region47: #{tpu_custom_call.1} parent=39 // pred_region
          %289 = dma.done [#allocation7], 256
        $region48: #{tpu_custom_call.1} parent=39 // pred_fallthru
          _
        %s290 = sand.u32 %s52, 1
        %s291 = scalar_lea.sflag [#allocation4], %s290
        %s292 = sand.u32 %s52, 1
        %s293 = smul.addr %s292, 8
        %s294 = scalar_lea.vmem [#allocation3], %s293
        %p295 = pneg %p65
        %p296 = pneg %p62
        %p297 = scmp.lt.s32.totalorder %s28, 1
        %s298 = scalar_select %p297, %s28, 1
        %s299 = scalar_lea.vmem %s1, %s298
        %p300 = pneg %p91
        %p301 = pneg %p88
        %p302 = scmp.lt.s32.totalorder %s28, 1
        %s303 = scalar_select %p302, %s28, 1
        %s304 = scalar_lea.vmem %s2, %s303
        %p305 = pneg %p117
        %p306 = pneg %p114
        %p307 = pneg %p143
        %p308 = pneg %p140
        %p309 = scmp.lt.s32.totalorder %s30, 0
        %s310 = scalar_select %p309, %s30, 0
        %s311 = scalar_lea.vmem %s4, %s310
        %p312 = pneg %p169
        %p313 = pneg %p166
        %p314 = pneg %p199
        %p315 = pneg %p196
        %s316 = sand.u32 %s186, 1
        %s317 = scalar_lea.sflag [#allocation5], %s316
        %s318 = sand.u32 %s186, 1
        %s319 = smul.addr %s318, 4
        %s320 = scalar_lea.vmem [#allocation8], %s319
        %p321 = scmp.lt.s32.totalorder %s28, 1
        %s322 = scalar_select %p321, %s28, 1
        %s323 = scalar_lea.vmem %s1, %s322
        %p324 = scmp.lt.s32.totalorder %s28, 1
        %s325 = scalar_select %p324, %s28, 1
        %s326 = scalar_lea.vmem %s2, %s325
        %p327 = scmp.lt.s32.totalorder %s30, 0
        %s328 = scalar_select %p327, %s30, 0
        %s329 = scalar_lea.vmem %s4, %s328
        %p331 = scmp.eq.s32.totalorder %s30, 0
        // Predicated region
        $region49: #{tpu_custom_call.1} parent=39 // pred_check
          %p332 = pneg %p331
        $region50: #{tpu_custom_call.1} parent=39 // pred_check_branch
          %334 = sbr.rel (%p332) target = $region52
        $region51: #{tpu_custom_call.1} parent=39 // pred_region
          %v335 = vld [vmem:[%s281] sm:$0xff]
          %vm336 = vcmask 261120
          %v337 = vsel %vm336, %v335, 0.0
          %338 = vadd.xlane.f32.xlu0 %v337
          %v339 = vpop.xlane.xlu0 %338
          %v340 = vrcp.pop 32.0
          %v341 = vmul.f32 %v339, %v340
          %v342 = vsub.f32 %v335, %v341
          %v343 = vmul.f32 %v342, %v342
          %v344 = vsel %vm336, %v343, 0.0
          %345 = vadd.xlane.f32.xlu0 %v344
          %v346 = vpop.xlane.xlu0 %345
          %v347 = vmul.f32 %v346, %v340
          %v348 = vadd.f32 %v347, 1e-05
          %v349 = vrsqrt.pop %v348
          %v350 = vmul.f32 %v342, %v349
          %v351 = vld [vmem:[%s323] sm:$0x1]
          %v353 = vlaneseq
          %v354 = vshrl.u32 %v353, 7
          %v355 = vsub.s32 0, %v354
          %v356 = vrot.slane %v351, %v355
          %v358 = vmul.f32 %v350, %v356
          %v359 = vld [vmem:[%s326] sm:$0x1]
          %v361 = vlaneseq
          %v362 = vshrl.u32 %v361, 7
          %v363 = vsub.s32 0, %v362
          %v364 = vrot.slane %v359, %v363
          %v366 = vadd.f32 %v358, %v364
          %v367 = vpack.c.bf16 %v366, %v366
          %vm368 = vcmask 257024
          %369 = vst.msk [vmem:[#allocation2] sm:$0xf] %vm368, %v367
        $region52: #{tpu_custom_call.1} parent=39 // pred_fallthru
          _
        %v370 = vld [vmem:[#allocation2] sm:$0xf]
        %v371 = vld [vmem:[#allocation6] sm:$0xf]
        %v372 = vld [vmem:[#allocation6 + $0x4] sm:$0xf]
        %v373 = vld [vmem:[#allocation6 + $0x8] sm:$0xf]
        %v374 = vld [vmem:[#allocation6 + $0xc] sm:$0xf]
        %v375 = vld [vmem:[%s329] sm:$0x1]
        %v377 = vlaneseq
        %v378 = vshrl.u32 %v377, 7
        %v379 = vsub.s32 0, %v378
        %v380 = vrot.slane %v375, %v379
        %v386 = vunpack.c.l.b16 %v371
        %v387 = vunpack.c.l.b16 %v372
        %v388 = vunpack.c.l.b16 %v373
        %v389 = vunpack.c.l.b16 %v374
        %v390 = vpack.c.b16 %v387, %v386
        %v391 = vpack.c.b16 %v389, %v388
        %vm394 = vcmask 261120
        %v396 = vsel %vm394, %v370, 0
        %398 = vmatprep.subr.bf16.mxu0 0
        %399 = vmatpush1.bf16.msra.mxu0 %v390
        %400 = vmatprep.subr.bf16.mxu0 0
        %401 = vmatpush1.bf16.msra.mxu0 %v391
        %402 = vmatprep.subr.bf16.mxu0 0
        %403 = vmatpush1.bf16.msra.mxu0 0
        %404 = vmatprep.subr.bf16.mxu0 0
        %405 = vmatpush1.bf16.msra.mxu0 0
        %406 = vmatprep.subr.bf16.mxu0 0
        %407 = vmatpush1.bf16.msra.mxu0 0
        %408 = vmatprep.subr.bf16.mxu0 0
        %409 = vmatpush1.bf16.msra.mxu0 0
        %410 = vmatprep.subr.bf16.mxu0 0
        %411 = vmatpush1.bf16.msra.mxu0 0
        %412 = vmatprep.subr.bf16.mxu0 0
        %413 = vmatpush1.bf16.msra.mxu0 0
        %414 = vmatprep.subr.bf16.mxu0 0
        %415 = vmatpush1.bf16.msra.mxu0 0
        %416 = vmatprep.subr.bf16.mxu0 0
        %417 = vmatpush1.bf16.msra.mxu0 0
        %418 = vmatprep.subr.bf16.mxu0 0
        %419 = vmatpush1.bf16.msra.mxu0 0
        %420 = vmatprep.subr.bf16.mxu0 0
        %421 = vmatpush1.bf16.msra.mxu0 0
        %422 = vmatprep.subr.bf16.mxu0 0
        %423 = vmatpush1.bf16.msra.mxu0 0
        %424 = vmatprep.subr.bf16.mxu0 0
        %425 = vmatpush1.bf16.msra.mxu0 0
        %426 = vmatprep.subr.bf16.mxu0 0
        %427 = vmatpush1.bf16.msra.mxu0 0
        %428 = vmatprep.subr.bf16.mxu0 0
        %429 = vmatpush1.bf16.msra.mxu0 0
        %430 = vmatprep.mubr.bf16.mxu0 0
        %431 = vmatmul.mubr.bf16.gmra.mrb[0].mxu0 %v396
        %v432 = vpop.f32.mrb[0].mxu0
        %v433 = vadd.f32 %v380, %v432
        %v434 = vpop.f32.mrb[0].mxu0
        %v435 = vpop.f32.mrb[0].mxu0
        %v436 = vpop.f32.mrb[0].mxu0
        %437 = vdwg.mxu0
        %v438 = vpack.c.bf16 %v433, %v433
        %439 = vst [vmem:[%s320] sm:$0xf] %v438
        %s440 = sand.u32 %s186, 1
        %s441 = scalar_lea.sflag [#allocation5], %s440
        %s442 = sand.u32 %s186, 1
        %s443 = smul.addr %s442, 4
        %s444 = scalar_lea.vmem [#allocation8], %s443
        // Predicated region
        $region53: #{tpu_custom_call.1} parent=39 // pred_check
          %p445 = pneg %p196
        $region54: #{tpu_custom_call.1} parent=39 // pred_check_branch
          %447 = sbr.rel (%p445) target = $region56
        $region55: #{tpu_custom_call.1} parent=39 // pred_region
          %s449 = ssub.s32 64, 64
          %450 = vsyncadd %s441, %s449
          %s451 = sadd.s32 %s30, %s29
          %s452 = sadd.s32 %s451, %s28
          %s453 = smul.addr %s452, 64
          %s454 = scalar_lea.hbm %s5, %s453
          %s456 = sshll.u32 %s444, 4
          %s457 = int_to_ptr.vmem [resolvable:$true] %s456
          %459 = dma.vmem_to_hbm [thread:$0]  %s457, 64, %s454, %s441
        $region56: #{tpu_custom_call.1} parent=39 // pred_fallthru
          _
      $region40: #{tpu_custom_call.1} parent=5 // pred_fallthru
        _
      %p460 = scmp.le.s32.totalorder 2, %s18
      // Predicated region
      $region57: #{tpu_custom_call.1} parent=5 // pred_check
        %p461 = pneg %p460
      $region58: #{tpu_custom_call.1} parent=5 // pred_check_branch
        %463 = sbr.rel (%p461) target = $region60
      $region59: #{tpu_custom_call.1} parent=5 // pred_region
        %s464 = ssub.s32 %s18, 2
        // Predicated region
        $region61: #{tpu_custom_call.1} parent=59 // pred_check
          %p465 = pneg %p202
        $region62: #{tpu_custom_call.1} parent=59 // pred_check_branch
          %467 = sbr.rel (%p465) target = $region64
        $region63: #{tpu_custom_call.1} parent=59 // pred_region
          %s468 = sand.u32 %s187, 1
          %s469 = scalar_lea.sflag [#allocation5], %s468
          %s470 = sand.u32 %s187, 1
          %s471 = smul.addr %s470, 4
          %s472 = scalar_lea.vmem [#allocation8], %s471
          %473 = dma.done %s469, 64
        $region64: #{tpu_custom_call.1} parent=59 // pred_fallthru
          _
      $region60: #{tpu_custom_call.1} parent=5 // pred_fallthru
        _
    $region6: #{tpu_custom_call.1} parent=1 // loop_footer
      %s22 = sadd.s32 1, %s18
    $region7: #{tpu_custom_call.1} parent=1 // loop_footer_branch
      %17 = sbr.rel target = $region3
    $region8: #{tpu_custom_call.1} parent=1 // loop_exit
      _
    %474 = vsyncpa [#allocation4], 1
    %s475 = scalar_lea.sflag [#allocation4], 1
    %476 = vsyncpa %s475, 1
    %477 = vsyncpa [#allocation7], 1
    %478 = vsyncpa [#allocation5], 1
    %s479 = scalar_lea.sflag [#allocation5], 1
    %480 = vsyncpa %s479, 1

</llo_original>
